<compile_context>
chip_gen: v6e
topology: v6e:2x2x1
jax: 0.10.0
libtpu: 0.0.40
codegen_flags: <defaults>
</compile_context>

<pallas_src>
import jax
import jax.numpy as jnp
from jax import lax
from jax.experimental import pallas as pl
from jax.experimental.pallas import tpu as pltpu


def _weighted_sum_kernel(x_ref, w_ref, b_ref, o_ref):
    # x: (TB, K), w: (2, K) [PyTorch layout, lane-dense], b: (1, 2)
    x = x_ref[...]
    w = w_ref[...]
    b = b_ref[...]
    # Contract K (last axis of both) -> (TB, 2), f32 accumulate on the MXU.
    acc = lax.dot_general(
        x, w,
        dimension_numbers=(((1,), (1,)), ((), ())),
        preferred_element_type=jnp.float32,
    )
    o_ref[...] = (acc + b.astype(jnp.float32)).astype(o_ref.dtype)


def _pick_batch_tile(B, K, itemsize, target_tile_bytes=4 << 20):
    """Largest sublane-aligned batch tile whose x slab is ~target_tile_bytes."""
    if B <= 8:
        return B                      # full-extent block; no alignment needed
    tb = target_tile_bytes // max(1, K * itemsize)
    tb = min(tb, B, 4096)
    tb = max(8, (tb // 8) * 8)        # keep sublane (8) aligned when tiling
    if tb >= B:
        return B
    return tb


def weighted_sum(x, weight, bias, *, block_batch=None, force_pallas=False):
    """Equivalent of nn.Linear(num_input, 2): out = x @ weight.T + bias.

    x:      (B, num_input)  (or (..., num_input); leading dims are flattened)
    weight: (2, num_input)  -- PyTorch convention (kept as-is, no transpose)
    bias:   (2,)
    returns (..., 2)
    """
    lead_shape = x.shape[:-1]
    K = x.shape[-1]
    x2 = x.reshape(-1, K)
    B = x2.shape[0]
    itemsize = jnp.dtype(x.dtype).itemsize

    # For tiny problems a standalone pallas_call (launch + DMA setup ~µs) is
    # strictly slower than the XLA fusion; dispatch to plain JAX unless forced.
    if not force_pallas and B * K * itemsize < (1 << 16):
        out = (x2 @ weight.T + bias).astype(x.dtype)
        return out.reshape(*lead_shape, 2)

    if block_batch is not None:
        tb = min(block_batch, B)
        if tb < B:
            tb = max(8, (tb // 8) * 8)
    else:
        tb = _pick_batch_tile(B, K, itemsize)

    grid = (pl.cdiv(B, tb),)

    cost = pl.CostEstimate(
        flops=4 * B * K,                      # 2*B*K*N with N=2
        transcendentals=0,
        bytes_accessed=(B * K + 2 * K + 2 + B * 2) * itemsize,
    )

    b2d = bias.reshape(1, 2)                  # 2D for TPU lane layout

    out = pl.pallas_call(
        _weighted_sum_kernel,
        out_shape=jax.ShapeDtypeStruct((B, 2), x.dtype),
        grid_spec=pltpu.PrefetchScalarGridSpec(
            num_scalar_prefetch=0,
            grid=grid,
            in_specs=[
                # x streams through, one batch tile per grid step (pipelined).
                pl.BlockSpec((tb, K), lambda i: (i, 0)),
                # weight / bias stay VMEM-resident (constant index_map).
                pl.BlockSpec((2, K), lambda i: (0, 0)),
                pl.BlockSpec((1, 2), lambda i: (0, 0)),
            ],
            out_specs=pl.BlockSpec((tb, 2), lambda i: (i, 0)),
        ),
        compiler_params=pltpu.CompilerParams(
            dimension_semantics=("parallel",)),
        cost_estimate=cost,
    )(x2, weight, b2d)
    return out.reshape(*lead_shape, 2)


if __name__ == "__main__":
    key = jax.random.PRNGKey(0)
    k_x, k_w, k_b = jax.random.split(key, 3)

    batch = 8
    num_input = 32

    x = jax.random.normal(k_x, (batch, num_input), dtype=jnp.float32)
    # Deterministic "Linear" parameter init (uniform, PyTorch default bound).
    bound = 1.0 / (num_input ** 0.5)
    weight = jax.random.uniform(k_w, (2, num_input), minval=-bound, maxval=bound,
                                dtype=jnp.float32)
    bias = jax.random.uniform(k_b, (2,), minval=-bound, maxval=bound,
                              dtype=jnp.float32)

    # force_pallas=True so the Pallas kernel itself runs at this tiny test size.
    out = weighted_sum(x, weight, bias, force_pallas=True)
    out = jax.block_until_ready(out)

    # Correctness check against plain JAX reference.
    ref = x @ weight.T + bias
    assert out.shape == (batch, 2)
    assert jnp.allclose(out, ref, atol=1e-5, rtol=1e-5)

    print("KERNEL_OK")
</pallas_src>

<mosaic_0001>
module attributes {stable_mosaic.version = 11 : i64} {
  func.func @_weighted_sum_kernel(%arg0: i32, %arg1: memref<8x32xf32, #tpu.memory_space<vmem>>, %arg2: memref<2x32xf32, #tpu.memory_space<vmem>>, %arg3: memref<1x2xf32, #tpu.memory_space<vmem>>, %arg4: memref<8x2xf32, #tpu.memory_space<vmem>>) attributes {dimension_semantics = [#tpu.dimension_semantics<parallel>], iteration_bounds = array<i64: 1>, scalar_prefetch = 0 : i64, scratch_operands = 0 : i64, tpu.core_type = #tpu.core_type<tc>, window_params = [{transform_indices = @transform_0, window_bounds = array<i64: 8, 32>}, {pipeline_mode = #tpu.pipeline_mode<synchronous>, transform_indices = @transform_1, window_bounds = array<i64: 2, 32>}, {pipeline_mode = #tpu.pipeline_mode<synchronous>, transform_indices = @transform_2, window_bounds = array<i64: 1, 2>}, {transform_indices = @transform_3, window_bounds = array<i64: 8, 2>}]} {
    %c0 = arith.constant 0 : index
    %c0_0 = arith.constant 0 : index
    %0 = vector.load %arg1[%c0, %c0_0] : memref<8x32xf32, #tpu.memory_space<vmem>>, vector<8x32xf32>
    %c0_1 = arith.constant 0 : index
    %c0_2 = arith.constant 0 : index
    %1 = vector.load %arg2[%c0_1, %c0_2] : memref<2x32xf32, #tpu.memory_space<vmem>>, vector<2x32xf32>
    %c0_3 = arith.constant 0 : index
    %c0_4 = arith.constant 0 : index
    %2 = vector.load %arg3[%c0_3, %c0_4] : memref<1x2xf32, #tpu.memory_space<vmem>>, vector<1x2xf32>
    %cst = arith.constant dense<0.000000e+00> : vector<8x2xf32>
    %3 = tpu.matmul %0, %1, %cst {dimension_numbers = #tpu.dot_dimension_numbers<[1], [1], [0], [0], [0, 0, 1, 0], [], []>} : vector<8x32xf32>, vector<2x32xf32>, vector<8x2xf32> -> vector<8x2xf32>
    %4 = vector.broadcast %2 : vector<1x2xf32> to vector<8x2xf32>
    %5 = arith.addf %3, %4 : vector<8x2xf32>
    %c0_5 = arith.constant 0 : index
    %c0_6 = arith.constant 0 : index
    %6 = vector.load %arg4[%c0_5, %c0_6] : memref<8x2xf32, #tpu.memory_space<vmem>>, vector<8x2xf32>
    tpu.vector_store %arg4[%c0_5, %c0_6], %5 {strides = array<i32>} : memref<8x2xf32, #tpu.memory_space<vmem>>, vector<8x2xf32>,
    return
  }
  func.func @transform_0(%arg0: i32) -> (i32, i32) {
    %c0_i32 = arith.constant 0 : i32
    %c0_i32_0 = arith.constant 0 : i32
    return %arg0, %c0_i32 : i32, i32
  }
  func.func @transform_1(%arg0: i32) -> (i32, i32) {
    %c0_i32 = arith.constant 0 : i32
    %c0_i32_0 = arith.constant 0 : i32
    %c0_i32_1 = arith.constant 0 : i32
    return %c0_i32, %c0_i32_0 : i32, i32
  }
  func.func @transform_2(%arg0: i32) -> (i32, i32) {
    %c0_i32 = arith.constant 0 : i32
    %c0_i32_0 = arith.constant 0 : i32
    %c0_i32_1 = arith.constant 0 : i32
    return %c0_i32, %c0_i32_0 : i32, i32
  }
  func.func @transform_3(%arg0: i32) -> (i32, i32) {
    %c0_i32 = arith.constant 0 : i32
    %c0_i32_0 = arith.constant 0 : i32
    return %arg0, %c0_i32 : i32, i32
  }
}

</mosaic_0001>

<llo_original>
// kernel: tpu_custom_call.1
$region0: #{tpu_custom_call.1}
  #allocation0 [shape = 'u32[]', space=smem, size = 0x4, offset = 0x4, fixed_abs, tag = 'smem constant byte address 0x4 - core index']
  #allocation1 [shape = 'u32[144,128]{1,0:T(1,128)}', space=vmem, size = 0x12000, scoped, tag = 'internal scratch']
  %s0 = inlined_call_operand.hbm [shape: f32[8,32], index: 0, kind: input, shape index: {}]
  %s1 = inlined_call_operand.hbm [shape: f32[2,32], index: 1, kind: input, shape index: {}]
  %s2 = inlined_call_operand.vmem [shape: f32[1,2], index: 2, kind: input, shape index: {}]
  %s3 = inlined_call_operand.vmem [shape: f32[8,2], index: 3, kind: output, shape index: {}]
  %s4 = sld [smem:[#allocation0]]
  $region30: #{tpu_custom_call.1} parent=0
    _
  %s6 = ssub.s32 1, %s4
  %s7 = scalar_select 0, %s6, %s4
  $region1: #{tpu_custom_call.1} parent=0
    #allocation2 [shape = 'u8[4096]{0}', space=vmem, size = 0x1000, scoped, tag = 'input window, operand 0, single buffered']
    #allocation3 [shape = 's32[1]{0}', space=sflag, size = 0x4, scoped, tag = 'scoped memory for tpu_custom_call.1']
    #allocation4 [shape = 'u8[1024]{0}', space=vmem, size = 0x400, scoped, tag = 'input window, operand 1, single buffered']
    #allocation5 [shape = 's32[1]{0}', space=sflag, size = 0x4, scoped, tag = 'scoped memory for tpu_custom_call.1']
    %8 = vsyncpa [#allocation3], 0
    %9 = vsyncpa [#allocation5], 0
    // Predicated region
    $region2: #{tpu_custom_call.1} parent=1 // pred_check
      _
    $region3: #{tpu_custom_call.1} parent=1 // pred_check_branch
      %11 = sbr.rel (0) target = $region5
    $region4: #{tpu_custom_call.1} parent=1 // pred_region
      %s13 = ssub.s32 128, 128
      %14 = vsyncadd [#allocation3], %s13
      %s16 = sshll.u32 [#allocation2], 4
      %s17 = int_to_ptr.vmem [resolvable:$true] %s16
      %19 = dma.hbm_to_vmem [thread:$0]  %s0, 128, %s17, [#allocation3]
    $region5: #{tpu_custom_call.1} parent=1 // pred_fallthru
      _
    // Predicated region
    $region6: #{tpu_custom_call.1} parent=1 // pred_check
      _
    $region7: #{tpu_custom_call.1} parent=1 // pred_check_branch
      %21 = sbr.rel (0) target = $region9
    $region8: #{tpu_custom_call.1} parent=1 // pred_region
      %s23 = ssub.s32 32, 32
      %24 = vsyncadd [#allocation5], %s23
      %s26 = sshll.u32 [#allocation4], 4
      %s27 = int_to_ptr.vmem [resolvable:$true] %s26
      %29 = dma.hbm_to_vmem [thread:$0]  %s1, 32, %s27, [#allocation5]
    $region9: #{tpu_custom_call.1} parent=1 // pred_fallthru
      _
    // Predicated region
    $region10: #{tpu_custom_call.1} parent=1 // pred_check
      _
    $region11: #{tpu_custom_call.1} parent=1 // pred_check_branch
      %31 = sbr.rel (0) target = $region13
    $region12: #{tpu_custom_call.1} parent=1 // pred_region
      _
    $region13: #{tpu_custom_call.1} parent=1 // pred_fallthru
      _
    // Predicated region
    $region14: #{tpu_custom_call.1} parent=1 // pred_check
      _
    $region15: #{tpu_custom_call.1} parent=1 // pred_check_branch
      %33 = sbr.rel (0) target = $region17
    $region16: #{tpu_custom_call.1} parent=1 // pred_region
      %34 = dma.done [#allocation3], 128
    $region17: #{tpu_custom_call.1} parent=1 // pred_fallthru
      _
    // Predicated region
    $region18: #{tpu_custom_call.1} parent=1 // pred_check
      _
    $region19: #{tpu_custom_call.1} parent=1 // pred_check_branch
      %36 = sbr.rel (0) target = $region21
    $region20: #{tpu_custom_call.1} parent=1 // pred_region
      %37 = dma.done [#allocation5], 32
    $region21: #{tpu_custom_call.1} parent=1 // pred_fallthru
      _
    %v38 = vld [vmem:[#allocation2] sm:$0xff]
    %v39 = vld [vmem:[#allocation4] sm:$0x3]
    %v40 = vld [vmem:[%s2] sm:$0x1]
    %v42 = vlaneseq
    %v43 = vshrl.u32 %v42, 7
    %v44 = vsub.s32 0, %v43
    %v45 = vrot.slane %v40, %v44
    %vm47 = vcmask 261120
    %v49 = vsel %vm47, %v38, 0
    %v52 = vsel %vm47, %v39, 0
    %54 = vmatprep.subr.mxu0 0.0
    %55 = vmatpush1.xpose.msra.mxu0 0.0
    %56 = vmatprep.subr.mxu0 0.0
    %57 = vmatpush1.xpose.msra.mxu0 0.0
    %58 = vmatprep.subr.mxu0 0.0
    %59 = vmatpush1.xpose.msra.mxu0 0.0
    %60 = vmatprep.subr.mxu0 0.0
    %61 = vmatpush1.xpose.msra.mxu0 0.0
    %62 = vmatprep.subr.mxu0 0.0
    %63 = vmatpush1.xpose.msra.mxu0 0.0
    %64 = vmatprep.subr.mxu0 0.0
    %65 = vmatpush1.xpose.msra.mxu0 0.0
    %66 = vmatprep.subr.mxu0 0.0
    %67 = vmatpush1.xpose.msra.mxu0 0.0
    %68 = vmatprep.subr.mxu0 0.0
    %69 = vmatpush1.xpose.msra.mxu0 0.0
    %70 = vmatprep.subr.mxu0 0.0
    %71 = vmatpush1.xpose.msra.mxu0 0.0
    %72 = vmatprep.subr.mxu0 0.0
    %73 = vmatpush1.xpose.msra.mxu0 0.0
    %74 = vmatprep.subr.mxu0 0.0
    %75 = vmatpush1.xpose.msra.mxu0 0.0
    %76 = vmatprep.subr.mxu0 0.0
    %77 = vmatpush1.xpose.msra.mxu0 0.0
    %78 = vmatprep.subr.mxu0 0.0
    %79 = vmatpush1.xpose.msra.mxu0 0.0
    %80 = vmatprep.subr.mxu0 0.0
    %81 = vmatpush1.xpose.msra.mxu0 0.0
    %82 = vmatprep.subr.mxu0 0.0
    %83 = vmatpush1.xpose.msra.mxu0 0.0
    %84 = vmatprep.subr.mxu0 0.0
    %85 = vmatpush1.xpose.msra.mxu0 %v52
    %86 = vmatprep.subr.mxu0 0.0
    %87 = vmatpush2.xpose.msra.mxu0 0.0
    %88 = vmatprep.subr.mxu0 0.0
    %89 = vmatpush2.xpose.msra.mxu0 0.0
    %90 = vmatprep.subr.mxu0 0.0
    %91 = vmatpush2.xpose.msra.mxu0 0.0
    %92 = vmatprep.subr.mxu0 0.0
    %93 = vmatpush2.xpose.msra.mxu0 0.0
    %94 = vmatprep.subr.mxu0 0.0
    %95 = vmatpush2.xpose.msra.mxu0 0.0
    %96 = vmatprep.subr.mxu0 0.0
    %97 = vmatpush2.xpose.msra.mxu0 0.0
    %98 = vmatprep.subr.mxu0 0.0
    %99 = vmatpush2.xpose.msra.mxu0 0.0
    %100 = vmatprep.subr.mxu0 0.0
    %101 = vmatpush2.xpose.msra.mxu0 0.0
    %102 = vmatprep.subr.mxu0 0.0
    %103 = vmatpush2.xpose.msra.mxu0 0.0
    %104 = vmatprep.subr.mxu0 0.0
    %105 = vmatpush2.xpose.msra.mxu0 0.0
    %106 = vmatprep.subr.mxu0 0.0
    %107 = vmatpush2.xpose.msra.mxu0 0.0
    %108 = vmatprep.subr.mxu0 0.0
    %109 = vmatpush2.xpose.msra.mxu0 0.0
    %110 = vmatprep.subr.mxu0 0.0
    %111 = vmatpush2.xpose.msra.mxu0 0.0
    %112 = vmatprep.subr.mxu0 0.0
    %113 = vmatpush2.xpose.msra.mxu0 0.0
    %114 = vmatprep.subr.mxu0 0.0
    %115 = vmatpush2.xpose.msra.mxu0 0.0
    %116 = vmatprep.subr.mxu0 0.0
    %117 = vmatpush2.xpose.msra.mxu0 0.0
    %118 = vmatprep.mubr.f32.mxu0 0.0
    %119 = vmatmul.mubr.f32.gmra.mxu0 %v49
    %v120 = vpop.f32.mrf.mxu0
    %v121 = vadd.f32 %v45, %v120
    %v122 = vpop.f32.mrf.mxu0
    %123 = vdwg.mxu0
    %vm124 = vcmask 15360
    %125 = vst.msk [vmem:[%s3] sm:$0xff] %vm124, %v121
    // Predicated region
    $region22: #{tpu_custom_call.1} parent=1 // pred_check
      _
    $region23: #{tpu_custom_call.1} parent=1 // pred_check_branch
      %127 = sbr.rel (0) target = $region25
    $region24: #{tpu_custom_call.1} parent=1 // pred_region
      _
    $region25: #{tpu_custom_call.1} parent=1 // pred_fallthru
      _
    // Predicated region
    $region26: #{tpu_custom_call.1} parent=1 // pred_check
      _
    $region27: #{tpu_custom_call.1} parent=1 // pred_check_branch
      %129 = sbr.rel (0) target = $region29
    $region28: #{tpu_custom_call.1} parent=1 // pred_region
      _
    $region29: #{tpu_custom_call.1} parent=1 // pred_fallthru
      _
    %130 = vsyncpa [#allocation3], 1
    %131 = vsyncpa [#allocation5], 1

</llo_original>
